<compile_context>
chip_gen: v6e
topology: v6e:2x2x1
jax: 0.10.0
libtpu: 0.0.40
codegen_flags: <defaults>
</compile_context>

<pallas_src>
import functools

import jax
import jax.numpy as jnp
from jax.experimental import pallas as pl
from jax.experimental.pallas import tpu as pltpu


# ----------------------------------------------------------------------------
# helpers
# ----------------------------------------------------------------------------
def _pick_tile(n, bytes_per_row, *, max_tile=8192, vmem_budget=8 << 20):
    """Largest row tile (multiple of 8) dividing n whose per-tile footprint fits the VMEM
    budget, preferring >=2 grid steps (so both TensorCores get work on v7x).  Falls back
    to the full extent when n has no suitable divisor."""
    cap = min(max_tile, n, max(8, vmem_budget // max(int(bytes_per_row), 1)))
    best = None
    for t in range(8, cap + 1, 8):
        if n % t == 0:
            if n // t >= 2:
                best = t                      # largest divisor keeping >=2 grid steps
            elif best is None:
                best = t                      # single-step fallback
    return best if best is not None else n


def _weight_specs(arrs):
    """Full-array (resident) blocks for small weight/bias tensors (constant index_map,
    so the pipeline fetches them once and never re-DMAs)."""
    return [pl.BlockSpec(a.shape, lambda i, nd=a.ndim: (0,) * nd) for a in arrs]


def _mlp(h, layers):
    """Linear->ReLU stack with a plain final Linear (weight/bias values already loaded)."""
    nl = len(layers)
    for i, (w, b) in enumerate(layers):
        h = jnp.dot(h, w, preferred_element_type=jnp.float32) + b
        if i < nl - 1:
            h = jnp.maximum(h, 0.0)
    return h


_VMEM_LIMIT = 32 << 20   # generation-safe scoped-VMEM limit (v5e 128 MiB phys / 16 MiB
                         # default, v6e 128/32, v7x 64/32) -- raise v5e, never exceed v7x.


# ----------------------------------------------------------------------------
# Pallas kernels
# ----------------------------------------------------------------------------
def node_table_kernel(*refs, n_phi_layers):
    """Per-node source terms, computed ONCE per node (hoisted out of the k-neighbor loop):
         B  = x @ (phi_w - theta_w)    [TN, out_x]   (theta/phi linearity)
         P  = phi_en(en)               [TN, out_en]  (full 4-layer MLP, once per node)
         E1 = en @ theta_en_W1         [TN, f1]      (first theta_en layer, hoisted)
       written as one lane-dense slab [TN, out_x + out_en + f1]."""
    x_ref, en_ref, sw_ref, tew1_ref = refs[0:4]
    phi = [(refs[4 + 2 * i][...], refs[4 + 2 * i + 1][...]) for i in range(n_phi_layers)]
    out_ref = refs[4 + 2 * n_phi_layers]

    en = en_ref[...]
    b_src = jnp.dot(x_ref[...], sw_ref[...], preferred_element_type=jnp.float32)
    p_src = _mlp(en, phi)
    e1_src = jnp.dot(en, tew1_ref[...], preferred_element_type=jnp.float32)
    out_ref[...] = jnp.concatenate([b_src, p_src, e1_src], axis=1)


def edge_aggregate_kernel(*refs, k, out_x, out_en, n_rest_layers):
    """Edge message + per-node max/mean aggregation for one node tile.

    gathered block layout (built K-major in glue): e_ref[m, v, :] = table[idx[v, m]] =
        [ B_src | P_src | E1_src ]   (C = out_x + out_en + f1 lanes)
    """
    x_ref, en_ref, e_ref, tw_ref, db_ref, tew1_ref, teb1_ref = refs[0:7]
    rest = [(refs[7 + 2 * i][...], refs[7 + 2 * i + 1][...]) for i in range(n_rest_layers)]
    out_ref = refs[7 + 2 * n_rest_layers]

    tn = x_ref.shape[0]
    f1 = tew1_ref.shape[1]
    e = e_ref[...]                                           # single load [k, TN, C]

    # x branch: destination-only matmul + max over gathered per-source terms
    #   edge_x = x_dst@tw + (tb+pb) + x_src@(pw-tw); max commutes with the dst constant.
    a = jnp.dot(x_ref[...], tw_ref[...], preferred_element_type=jnp.float32) + db_ref[...]
    x_new = a + jnp.max(e[:, :, :out_x], axis=0)

    # phi_en(en_src): precomputed per node (kernel 1), gathered -> just a sum over slots.
    p_sum = jnp.sum(e[:, :, out_x:out_x + out_en], axis=0)

    # theta_en: first Linear hoisted -> per-edge work is subtract (+ReLU) + remaining
    # layers, batched over all k*TN edge rows at once (leading-axis reshape is layout-free
    # when TN is a multiple of 8, which _pick_tile guarantees or TN == N).
    e1_dst = (jnp.dot(en_ref[...], tew1_ref[...], preferred_element_type=jnp.float32)
              + teb1_ref[...])
    diff = e1_dst[None, :, :] - e[:, :, out_x + out_en:]
    if n_rest_layers > 0:
        diff = jnp.maximum(diff, 0.0)                        # ReLU after hoisted layer 1
    t = _mlp(diff.reshape(k * tn, f1), rest)                 # [k*TN, out_en]
    t_sum = jnp.sum(t.reshape(k, tn, out_en), axis=0)

    en_new = (p_sum + t_sum) * (1.0 / float(k))              # fn.mean aggregation

    # single lane-dense concatenated output slab; split in the wrapper
    out_ref[...] = jnp.concatenate([x_new, en_new], axis=1)


def knn_kernel(lhs_ref, rhst_ref, idx_ref, *, k, idx_bits):
    """Row-tiled Euclidean k-NN (self included, like dgl.knn_graph).

    ||x_i - x_j||^2 comes out of ONE dot of the pre-augmented operands:
        lhs[i] = [x_i | 1 | |x_i|^2],   rhs_t[:, j] = [-2 x_j ; |x_j|^2 ; 1].
    Top-k uses a packed key: the (non-negative, +1-biased so always-normal) distance with
    its low `idx_bits` mantissa bits replaced by the column index.  All keys in a row are
    distinct, so pick m is simply "min of keys strictly greater than pick m-1":
    one compare/select + one min sweep per neighbor, no key-slab rewrite."""
    d = jnp.dot(lhs_ref[...], rhst_ref[...], preferred_element_type=jnp.float32)  # [TR, N]
    d = jnp.maximum(d, 0.0) + 1.0            # clamp fp noise; +1 keeps keys normal (no FTZ)
    tr, n = d.shape

    mask = (1 << idx_bits) - 1
    col = jax.lax.broadcasted_iota(jnp.int32, (tr, n), 1)
    bits = pltpu.bitcast(d, jnp.int32)                       # monotone for non-negative f32
    keyb = jnp.bitwise_or(jnp.bitwise_and(bits, jnp.int32(~mask)), col)
    key = pltpu.bitcast(keyb, jnp.float32)                   # compare/reduce stays in f32

    big = jnp.float32(jnp.finfo(jnp.float32).max)
    prev = jnp.full((tr, 1), -1.0, jnp.float32)
    picks = []
    for _ in range(k):                                       # k is small & static
        cand = jnp.where(key > prev, key, big)
        kmin = jnp.min(cand, axis=1, keepdims=True)
        picks.append(kmin)
        prev = kmin

    # single lane-contiguous [TR, k] store; column index recovered from the low key bits
    packed = pltpu.bitcast(jnp.concatenate(picks, axis=1), jnp.int32)
    idx_ref[...] = jnp.bitwise_and(packed, jnp.int32(mask))


# ----------------------------------------------------------------------------
# Wrappers
# ----------------------------------------------------------------------------
def knn_indices(x, k):
    n, f = x.shape
    k = min(k, n)                                   # mirrors the `n_part < self.k` branch
    idx_bits = max(1, (n - 1).bit_length())
    assert idx_bits <= 23, "packed-key knn needs the column index to fit the f32 mantissa"

    # hoisted out of the kernel: squared norms, the -2 scale and both concatenations; the
    # transposed table is laid out once and stays block-resident across all grid steps.
    sq = jnp.sum(x * x, axis=1, keepdims=True)                               # [N, 1]
    lhs = jnp.concatenate([x, jnp.ones((n, 1), x.dtype), sq], axis=1)        # [N, F+2]
    rhs_t = jnp.concatenate([-2.0 * x.T, sq.T, jnp.ones((1, n), x.dtype)], axis=0)  # [F+2, N]

    # ~5 live [TR, N] f32/i32 slabs + the resident rhs_t bound the row tile.
    # TODO(synk): for very large N this should column-tile with a streaming running-top-k;
    # the current kernel keeps full-N rows (and the full rhs_t) in VMEM.
    rhs_bytes = 2 * (f + 2) * n * 4
    budget = max(1 << 20, (8 << 20) - rhs_bytes)
    tr = _pick_tile(n, 4 * (5 * n + 2 * (f + 2)), max_tile=1024, vmem_budget=budget)

    return pl.pallas_call(
        functools.partial(knn_kernel, k=k, idx_bits=idx_bits),
        grid=(n // tr,),
        in_specs=[pl.BlockSpec((tr, f + 2), lambda i: (i, 0)),     # row tile
                  pl.BlockSpec((f + 2, n), lambda i: (0, 0))],     # full table, resident
        out_specs=pl.BlockSpec((tr, k), lambda i: (i, 0)),
        out_shape=jax.ShapeDtypeStruct((n, k), jnp.int32),
        compiler_params=pltpu.CompilerParams(dimension_semantics=("parallel",),
                                             vmem_limit_bytes=_VMEM_LIMIT),
    )(lhs, rhs_t)


def edge_conv_apply(x, en, idx, params):
    """One EdgeConv message + max/mean aggregation pass on the graph defined by `idx`."""
    n, fx = x.shape
    fe = en.shape[1]
    k = idx.shape[1]
    tw, tb = params["theta"]
    pw, pb = params["phi"]
    out_x = tw.shape[1]
    te_layers = params["theta_en"]
    pe_layers = params["phi_en"]
    out_en = te_layers[-1][0].shape[1]
    te_w1, te_b1 = te_layers[0]
    f1 = te_w1.shape[1]
    te_rest = te_layers[1:]
    n_pe, n_rest = len(pe_layers), len(te_rest)

    # parameter preprocessing (done once, not per edge / per tile)
    src_w = pw - tw              # theta linearity: (phi - theta) applied to the source node
    dst_b = tb + pb              # both x-branch biases fold into the destination-only term

    pe_flat = [p for wb in pe_layers for p in wb]
    te_rest_flat = [p for wb in te_rest for p in wb]

    c_tab = out_x + out_en + f1          # per-node table width
    c_out = out_x + out_en               # concatenated output width

    # VMEM-budgeted node tile (double-buffered tiled blocks + in-kernel temporaries);
    # _pick_tile keeps >=2 grid steps so both v7x TensorCores are used.
    bpr = 4 * (2 * (fx + fe + c_out) + 5 * k * c_tab)
    tn = _pick_tile(n, bpr, max_tile=8192, vmem_budget=8 << 20)

    cparams = pltpu.CompilerParams(dimension_semantics=("parallel",),
                                   vmem_limit_bytes=_VMEM_LIMIT)

    # ---- kernel 1: per-node source table  [N, out_x + out_en + f1] -------------------
    table = pl.pallas_call(
        functools.partial(node_table_kernel, n_phi_layers=n_pe),
        grid=(n // tn,),
        in_specs=[pl.BlockSpec((tn, fx), lambda i: (i, 0)),
                  pl.BlockSpec((tn, fe), lambda i: (i, 0))]
                 + _weight_specs([src_w, te_w1] + pe_flat),
        out_specs=pl.BlockSpec((tn, c_tab), lambda i: (i, 0)),
        out_shape=jax.ShapeDtypeStruct((n, c_tab), jnp.float32),
        compiler_params=cparams,
    )(x, en, src_w, te_w1, *pe_flat)

    # ---- glue: gather the per-node table for each neighbor slot, K-major -------------
    # TODO(synk): the data-dependent row gather stays in XLA glue (no robust in-kernel
    # dynamic row-gather primitive on TPU Pallas); it is now a SINGLE K-major gather of
    # the small precomputed table (no en-difference tensor, no transpose pass).
    edge_src = table[idx.T]                                  # [K, N, c_tab]

    # ---- kernel 2: per-edge message + max/mean aggregation ---------------------------
    out = pl.pallas_call(
        functools.partial(edge_aggregate_kernel, k=k, out_x=out_x, out_en=out_en,
                          n_rest_layers=n_rest),
        grid=(n // tn,),
        in_specs=[pl.BlockSpec((tn, fx), lambda i: (i, 0)),
                  pl.BlockSpec((tn, fe), lambda i: (i, 0)),
                  pl.BlockSpec((k, tn, c_tab), lambda i: (0, i, 0))]
                 + _weight_specs([tw, dst_b, te_w1, te_b1] + te_rest_flat),
        out_specs=pl.BlockSpec((tn, c_out), lambda i: (i, 0)),
        out_shape=jax.ShapeDtypeStruct((n, c_out), jnp.float32),
        compiler_params=cparams,
    )(x, en, edge_src, tw, dst_b, te_w1, te_b1, *te_rest_flat)

    return out[:, :out_x], out[:, out_x:]


def edge_conv_forward(x, en, idx, params, k_val):
    """Full EdgeConv.forward (batch_norm=False path): message -> max/mean aggregate
    -> rebuild the k-NN graph on the new 'x' features."""
    x_new, en_new = edge_conv_apply(x, en, idx, params)
    idx_new = knn_indices(x_new, k_val)          # g_new = dgl.knn_graph(x_new, k)
    return idx_new, x_new, en_new                # (graph adjacency, ndata['x'], ndata['en'])


# ----------------------------------------------------------------------------
# Pure-JAX reference (original per-edge formulation) for a correctness check
# ----------------------------------------------------------------------------
def edge_conv_reference(x, en, idx, params):
    tw, tb = params["theta"]
    pw, pb = params["phi"]

    def mlp(h, layers):
        for i, (w, b) in enumerate(layers):
            h = h @ w + b
            if i < len(layers) - 1:
                h = jnp.maximum(h, 0.0)
        return h

    x_src = x[idx]                                   # [N, K, Fx]
    en_src = en[idx]                                 # [N, K, Fe]
    edge_x = (x[:, None, :] - x_src) @ tw + tb + x_src @ pw + pb
    edge_en = mlp(en[:, None, :] - en_src, params["theta_en"]) + mlp(en_src, params["phi_en"])
    return jnp.max(edge_x, axis=1), jnp.mean(edge_en, axis=1)


# ----------------------------------------------------------------------------
# Deterministic parameter init
# ----------------------------------------------------------------------------
def _linear(key, fan_in, fan_out, scale=0.1):
    kw, kb = jax.random.split(key)
    w = scale * jax.random.normal(kw, (fan_in, fan_out), jnp.float32)
    b = scale * jax.random.normal(kb, (1, fan_out), jnp.float32)
    return w, b


def init_params(key, in_feat_x, out_feat_x, in_feat_en, out_feat_en, features=(4, 5, 4)):
    dims = [in_feat_en] + list(features) + [out_feat_en]
    n_layers = len(dims) - 1
    keys = jax.random.split(key, 2 + 2 * n_layers)
    theta = _linear(keys[0], in_feat_x, out_feat_x)
    phi = _linear(keys[1], in_feat_x, out_feat_x)
    theta_en = [_linear(keys[2 + i], dims[i], dims[i + 1]) for i in range(n_layers)]
    phi_en = [_linear(keys[2 + n_layers + i], dims[i], dims[i + 1]) for i in range(n_layers)]
    return {"theta": theta, "phi": phi, "theta_en": theta_en, "phi_en": phi_en}


# ----------------------------------------------------------------------------
if __name__ == "__main__":
    key = jax.random.PRNGKey(0)
    N = 16                      # number of graph nodes
    in_feat_x, out_feat_x = 4, 8
    in_feat_en, out_feat_en = 3, 4
    k_val = 5

    kx, ke, kp = jax.random.split(key, 3)
    x = jax.random.normal(kx, (N, in_feat_x), jnp.float32)
    en = jax.random.normal(ke, (N, in_feat_en), jnp.float32)
    params = init_params(kp, in_feat_x, out_feat_x, in_feat_en, out_feat_en)

    # Input graph g: k-NN graph over the input node positions (as dgl.knn_graph gives).
    idx0 = knn_indices(x, k_val)
    jax.block_until_ready(idx0)

    # light k-NN sanity checks: indices in range, self-loop included (self distance == 0)
    assert bool(jnp.all((idx0 >= 0) & (idx0 < N))), "knn index out of range"
    assert bool(jnp.all(jnp.any(idx0 == jnp.arange(N)[:, None], axis=1))), "knn missing self"

    # TODO(synk): the DGL graph object itself has no Pallas equivalent; the "graph" is
    # returned as (idx_new, x_new, en_new).
    idx_new, x_new, en_new = edge_conv_forward(x, en, idx0, params, k_val)
    jax.block_until_ready((idx_new, x_new, en_new))

    # correctness check of the refactored message/aggregation against the original math
    x_expect, en_expect = edge_conv_reference(x, en, idx0, params)
    assert jnp.allclose(x_new, x_expect, atol=1e-4, rtol=1e-4), "x aggregation mismatch"
    assert jnp.allclose(en_new, en_expect, atol=1e-4, rtol=1e-4), "en aggregation mismatch"

    assert idx_new.shape == (N, min(k_val, N)) and idx_new.dtype == jnp.int32
    assert x_new.shape == (N, out_feat_x)
    assert en_new.shape == (N, out_feat_en)
    print("KERNEL_OK")
</pallas_src>

<mosaic_0001>
module attributes {stable_mosaic.version = 11 : i64} {
  func.func @knn_kernel(%arg0: i32, %arg1: memref<8x6xf32, #tpu.memory_space<vmem>>, %arg2: memref<6x16xf32, #tpu.memory_space<vmem>>, %arg3: memref<8x5xi32, #tpu.memory_space<vmem>>) attributes {dimension_semantics = [#tpu.dimension_semantics<parallel>], iteration_bounds = array<i64: 2>, scalar_prefetch = 0 : i64, scratch_operands = 0 : i64, tpu.core_type = #tpu.core_type<tc>, window_params = [{transform_indices = @transform_0, window_bounds = array<i64: 8, 6>}, {pipeline_mode = #tpu.pipeline_mode<synchronous>, transform_indices = @transform_1, window_bounds = array<i64: 6, 16>}, {transform_indices = @transform_2, window_bounds = array<i64: 8, 5>}]} {
    %c0 = arith.constant 0 : index
    %c0_0 = arith.constant 0 : index
    %0 = vector.load %arg1[%c0, %c0_0] : memref<8x6xf32, #tpu.memory_space<vmem>>, vector<8x6xf32>
    %c0_1 = arith.constant 0 : index
    %c0_2 = arith.constant 0 : index
    %1 = vector.load %arg2[%c0_1, %c0_2] : memref<6x16xf32, #tpu.memory_space<vmem>>, vector<6x16xf32>
    %cst = arith.constant dense<0.000000e+00> : vector<8x16xf32>
    %2 = tpu.matmul %0, %1, %cst {dimension_numbers = #tpu.dot_dimension_numbers<[1], [0], [0], [1], [0, 0, 1, 1], [], []>} : vector<8x6xf32>, vector<6x16xf32>, vector<8x16xf32> -> vector<8x16xf32>
    %cst_3 = arith.constant 0.000000e+00 : f32
    %3 = vector.broadcast %cst_3 : f32 to vector<8x16xf32>
    %4 = arith.maximumf %2, %3 : vector<8x16xf32>
    %cst_4 = arith.constant 1.000000e+00 : f32
    %5 = vector.broadcast %cst_4 : f32 to vector<8x16xf32>
    %6 = arith.addf %4, %5 : vector<8x16xf32>
    %7 = tpu.iota {dimensions = array<i32: 1>} : vector<8x16xi32>
    %8 = tpu.bitcast %6 : vector<8x16xf32> -> vector<8x16xi32>
    %c-16_i32 = arith.constant -16 : i32
    %9 = vector.broadcast %c-16_i32 : i32 to vector<8x16xi32>
    %10 = arith.andi %8, %9 : vector<8x16xi32>
    %11 = arith.ori %10, %7 : vector<8x16xi32>
    %12 = tpu.bitcast %11 : vector<8x16xi32> -> vector<8x16xf32>
    %cst_5 = arith.constant -1.000000e+00 : f32
    %13 = vector.broadcast %cst_5 : f32 to vector<8x1xf32>
    %14 = vector.broadcast %13 : vector<8x1xf32> to vector<8x16xf32>
    %15 = arith.cmpf ogt, %12, %14 : vector<8x16xf32>
    %cst_6 = arith.constant 3.40282347E+38 : f32
    %16 = vector.broadcast %cst_6 : f32 to vector<8x16xf32>
    %17 = arith.select %15, %12, %16 : vector<8x16xi1>, vector<8x16xf32>
    %cst_7 = arith.constant dense<0x7F800000> : vector<8xf32>
    %18 = vector.multi_reduction <minimumf>, %17, %cst_7 [1] : vector<8x16xf32> to vector<8xf32>
    %19 = vector.shape_cast %18 : vector<8xf32> to vector<8x1xf32>
    %20 = vector.broadcast %19 : vector<8x1xf32> to vector<8x16xf32>
    %21 = arith.cmpf ogt, %12, %20 : vector<8x16xf32>
    %cst_8 = arith.constant 3.40282347E+38 : f32
    %22 = vector.broadcast %cst_8 : f32 to vector<8x16xf32>
    %23 = arith.select %21, %12, %22 : vector<8x16xi1>, vector<8x16xf32>
    %cst_9 = arith.constant dense<0x7F800000> : vector<8xf32>
    %24 = vector.multi_reduction <minimumf>, %23, %cst_9 [1] : vector<8x16xf32> to vector<8xf32>
    %25 = vector.shape_cast %24 : vector<8xf32> to vector<8x1xf32>
    %26 = vector.broadcast %25 : vector<8x1xf32> to vector<8x16xf32>
    %27 = arith.cmpf ogt, %12, %26 : vector<8x16xf32>
    %cst_10 = arith.constant 3.40282347E+38 : f32
    %28 = vector.broadcast %cst_10 : f32 to vector<8x16xf32>
    %29 = arith.select %27, %12, %28 : vector<8x16xi1>, vector<8x16xf32>
    %cst_11 = arith.constant dense<0x7F800000> : vector<8xf32>
    %30 = vector.multi_reduction <minimumf>, %29, %cst_11 [1] : vector<8x16xf32> to vector<8xf32>
    %31 = vector.shape_cast %30 : vector<8xf32> to vector<8x1xf32>
    %32 = vector.broadcast %31 : vector<8x1xf32> to vector<8x16xf32>
    %33 = arith.cmpf ogt, %12, %32 : vector<8x16xf32>
    %cst_12 = arith.constant 3.40282347E+38 : f32
    %34 = vector.broadcast %cst_12 : f32 to vector<8x16xf32>
    %35 = arith.select %33, %12, %34 : vector<8x16xi1>, vector<8x16xf32>
    %cst_13 = arith.constant dense<0x7F800000> : vector<8xf32>
    %36 = vector.multi_reduction <minimumf>, %35, %cst_13 [1] : vector<8x16xf32> to vector<8xf32>
    %37 = vector.shape_cast %36 : vector<8xf32> to vector<8x1xf32>
    %38 = vector.broadcast %37 : vector<8x1xf32> to vector<8x16xf32>
    %39 = arith.cmpf ogt, %12, %38 : vector<8x16xf32>
    %cst_14 = arith.constant 3.40282347E+38 : f32
    %40 = vector.broadcast %cst_14 : f32 to vector<8x16xf32>
    %41 = arith.select %39, %12, %40 : vector<8x16xi1>, vector<8x16xf32>
    %cst_15 = arith.constant dense<0x7F800000> : vector<8xf32>
    %42 = vector.multi_reduction <minimumf>, %41, %cst_15 [1] : vector<8x16xf32> to vector<8xf32>
    %43 = vector.shape_cast %42 : vector<8xf32> to vector<8x1xf32>
    %44 = tpu.concatenate %19, %25, %31, %37, %43 in 1 : vector<8x1xf32>, vector<8x1xf32>, vector<8x1xf32>, vector<8x1xf32>, vector<8x1xf32> -> vector<8x5xf32>
    %45 = tpu.bitcast %44 : vector<8x5xf32> -> vector<8x5xi32>
    %c15_i32 = arith.constant 15 : i32
    %46 = vector.broadcast %c15_i32 : i32 to vector<8x5xi32>
    %47 = arith.andi %45, %46 : vector<8x5xi32>
    %c0_16 = arith.constant 0 : index
    %c0_17 = arith.constant 0 : index
    %48 = vector.load %arg3[%c0_16, %c0_17] : memref<8x5xi32, #tpu.memory_space<vmem>>, vector<8x5xi32>
    tpu.vector_store %arg3[%c0_16, %c0_17], %47 {strides = array<i32>} : memref<8x5xi32, #tpu.memory_space<vmem>>, vector<8x5xi32>,
    return
  }
  func.func @transform_0(%arg0: i32) -> (i32, i32) {
    %c0_i32 = arith.constant 0 : i32
    %c0_i32_0 = arith.constant 0 : i32
    return %arg0, %c0_i32 : i32, i32
  }
  func.func @transform_1(%arg0: i32) -> (i32, i32) {
    %c0_i32 = arith.constant 0 : i32
    %c0_i32_0 = arith.constant 0 : i32
    %c0_i32_1 = arith.constant 0 : i32
    return %c0_i32, %c0_i32_0 : i32, i32
  }
  func.func @transform_2(%arg0: i32) -> (i32, i32) {
    %c0_i32 = arith.constant 0 : i32
    %c0_i32_0 = arith.constant 0 : i32
    return %arg0, %c0_i32 : i32, i32
  }
}

</mosaic_0001>

<llo_original>
// kernel: tpu_custom_call.1
$region0: #{tpu_custom_call.1}
  #allocation0 [shape = 'u32[]', space=smem, size = 0x4, offset = 0x4, fixed_abs, tag = 'smem constant byte address 0x4 - core index']
  #allocation1 [shape = 'u32[144,128]{1,0:T(1,128)}', space=vmem, size = 0x12000, scoped, tag = 'internal scratch']
  %s0 = inlined_call_operand.vmem [shape: f32[16,6], index: 0, kind: input, shape index: {}]
  %s1 = inlined_call_operand.vmem [shape: f32[6,16], index: 1, kind: input, shape index: {}]
  %s2 = inlined_call_operand.vmem [shape: s32[16,5], index: 2, kind: output, shape index: {}]
  %s3 = sld [smem:[#allocation0]]
  $region41: #{tpu_custom_call.1} parent=0
    _
  %s5 = ssub.s32 1, %s3
  %s6 = scalar_select 0, %s5, %s3
  loop: start=0, step=1, limit=4
  $region2: #{tpu_custom_call.1} parent=0 // loop_pre_header
    _
  $region3: #{tpu_custom_call.1} parent=0 // loop_header
    %s8 = sphi 0, %s12
    %p9 = scmp.ge.s32.totalorder %s8, 4
    %s18 = sphi 0, %s20
    %s21 = sphi 0, %s18
    %s22 = sphi 0, %s21
    %s38 = sphi 0, %s22
    %s42 = sphi 0, %s42
    %s44 = sphi 0, %s42
    %s45 = sphi 0, %s44
    %s59 = sphi 0, %s45
    %s65 = sphi 0, %s67
    %s68 = sphi 0, %s65
    %s69 = sphi 0, %s68
    %s85 = sphi 0, %s69
  $region4: #{tpu_custom_call.1} parent=0 // loop_header_branch
    %11 = sbr.rel (%p9) target = $region8
  $region5: #{tpu_custom_call.1} parent=0 // loop_body
    %s13 = ssub.s32 %s8, 1
    %s14 = ssub.s32 %s8, 2
    %s15 = sadd.s32 %s8, 1
    %s16 = ssub.s32 %s8, %s15
    %p17 = scmp.eq.s32.totalorder %s16, 0
    %s19 = sadd.s32 %s18, 1
    %s20 = scalar_select %p17, %s18, %s19
    %p23 = pneg %p17
    %p24 = scmp.eq.s32.totalorder %s8, 1
    %p25 = por %p23, %p24
    %p26 = scmp.ne.s32.totalorder %s18, %s21
    %p27 = scmp.eq.s32.totalorder %s8, 0
    %p28 = por %p26, %p27
    %p29 = scmp.ne.s32.totalorder %s18, %s21
    %p30 = scmp.eq.s32.totalorder %s13, 1
    %p31 = por %p29, %p30
    %p32 = scmp.ne.s32.totalorder %s21, %s22
    %p33 = scmp.eq.s32.totalorder %s13, 0
    %p34 = por %p32, %p33
    %p35 = scmp.ne.s32.totalorder %s21, %s22
    %p36 = scmp.eq.s32.totalorder %s14, 1
    %p37 = por %p35, %p36
    %p39 = scmp.ne.s32.totalorder %s22, %s38
    %p40 = scmp.eq.s32.totalorder %s14, 0
    %p41 = por %p39, %p40
    %s43 = sadd.s32 %s42, 1
    %p46 = scmp.eq.s32.totalorder %s8, 1
    %p47 = scmp.ne.s32.totalorder %s42, %s44
    %p48 = scmp.eq.s32.totalorder %s8, 0
    %p49 = por %p47, %p48
    %p50 = scmp.ne.s32.totalorder %s42, %s44
    %p51 = scmp.eq.s32.totalorder %s13, 1
    %p52 = por %p50, %p51
    %p53 = scmp.ne.s32.totalorder %s44, %s45
    %p54 = scmp.eq.s32.totalorder %s13, 0
    %p55 = por %p53, %p54
    %p56 = scmp.ne.s32.totalorder %s44, %s45
    %p57 = scmp.eq.s32.totalorder %s14, 1
    %p58 = por %p56, %p57
    %p60 = scmp.ne.s32.totalorder %s45, %s59
    %p61 = scmp.eq.s32.totalorder %s14, 0
    %p62 = por %p60, %p61
    %s63 = ssub.s32 %s8, %s15
    %p64 = scmp.eq.s32.totalorder %s63, 0
    %s66 = sadd.s32 %s65, 1
    %s67 = scalar_select %p64, %s65, %s66
    %p70 = pneg %p64
    %p71 = scmp.eq.s32.totalorder %s8, 1
    %p72 = por %p70, %p71
    %p73 = scmp.ne.s32.totalorder %s65, %s68
    %p74 = scmp.eq.s32.totalorder %s8, 0
    %p75 = por %p73, %p74
    %p76 = scmp.ne.s32.totalorder %s65, %s68
    %p77 = scmp.eq.s32.totalorder %s13, 1
    %p78 = por %p76, %p77
    %p79 = scmp.ne.s32.totalorder %s68, %s69
    %p80 = scmp.eq.s32.totalorder %s13, 0
    %p81 = por %p79, %p80
    %p82 = scmp.ne.s32.totalorder %s68, %s69
    %p83 = scmp.eq.s32.totalorder %s14, 1
    %p84 = por %p82, %p83
    %p86 = scmp.ne.s32.totalorder %s69, %s85
    %p87 = scmp.eq.s32.totalorder %s14, 0
    %p88 = por %p86, %p87
    %p89 = scmp.le.s32.totalorder 1, %s8
    %p90 = scmp.lt.s32.totalorder %s8, 3
    %p91 = pnand %p89, %p90
    %p92 = pneg %p91
    // Predicated region
    $region9: #{tpu_custom_call.1} parent=5 // pred_check
      _
    $region10: #{tpu_custom_call.1} parent=5 // pred_check_branch
      %94 = sbr.rel (%p91) target = $region12
    $region11: #{tpu_custom_call.1} parent=5 // pred_region
      %s95 = ssub.s32 %s8, 1
      // Predicated region
      $region13: #{tpu_custom_call.1} parent=11 // pred_check
        %p96 = pneg %p55
      $region14: #{tpu_custom_call.1} parent=11 // pred_check_branch
        %98 = sbr.rel (%p96) target = $region16
      $region15: #{tpu_custom_call.1} parent=11 // pred_region
        _
      $region16: #{tpu_custom_call.1} parent=11 // pred_fallthru
        _
    $region12: #{tpu_custom_call.1} parent=5 // pred_fallthru
      _
    %p99 = scmp.lt.s32.totalorder %s8, 2
    // Predicated region
    $region17: #{tpu_custom_call.1} parent=5 // pred_check
      %p100 = pneg %p99
    $region18: #{tpu_custom_call.1} parent=5 // pred_check_branch
      %102 = sbr.rel (%p100) target = $region20
    $region19: #{tpu_custom_call.1} parent=5 // pred_region
      // Predicated region
      $region21: #{tpu_custom_call.1} parent=19 // pred_check
        %p103 = pneg %p28
      $region22: #{tpu_custom_call.1} parent=19 // pred_check_branch
        %105 = sbr.rel (%p103) target = $region24
      $region23: #{tpu_custom_call.1} parent=19 // pred_region
        %p106 = scmp.lt.s32.totalorder %s8, 1
        %s107 = scalar_select %p106, %s8, 1
        %s108 = smul.addr %s107, 8
        %s109 = scalar_lea.vmem %s0, %s108
      $region24: #{tpu_custom_call.1} parent=19 // pred_fallthru
        _
    $region20: #{tpu_custom_call.1} parent=5 // pred_fallthru
      _
    %p110 = scmp.le.s32.totalorder 1, %s8
    %p111 = scmp.lt.s32.totalorder %s8, 3
    %p112 = pnand %p110, %p111
    %p113 = pneg %p112
    // Predicated region
    $region25: #{tpu_custom_call.1} parent=5 // pred_check
      _
    $region26: #{tpu_custom_call.1} parent=5 // pred_check_branch
      %115 = sbr.rel (%p112) target = $region28
    $region27: #{tpu_custom_call.1} parent=5 // pred_region
      %s116 = ssub.s32 %s8, 1
      %p117 = scmp.lt.s32.totalorder %s13, 1
      %s118 = scalar_select %p117, %s13, 1
      %s119 = smul.addr %s118, 8
      %s120 = scalar_lea.vmem %s0, %s119
      %p121 = pneg %p34
      %p122 = pneg %p31
      %p123 = pneg %p55
      %p124 = pneg %p52
      %p125 = pneg %p81
      %p126 = pneg %p78
      %p127 = scmp.lt.s32.totalorder %s13, 1
      %s128 = scalar_select %p127, %s13, 1
      %s129 = smul.addr %s128, 8
      %s130 = scalar_lea.vmem %s2, %s129
      %p131 = scmp.lt.s32.totalorder %s13, 1
      %s132 = scalar_select %p131, %s13, 1
      %s133 = smul.addr %s132, 8
      %s134 = scalar_lea.vmem %s0, %s133
      %p135 = scmp.lt.s32.totalorder %s13, 1
      %s136 = scalar_select %p135, %s13, 1
      %s137 = smul.addr %s136, 8
      %s138 = scalar_lea.vmem %s2, %s137
      %v139 = vld [vmem:[%s134] sm:$0xff]
      %v140 = vld [vmem:[%s1] sm:$0x3f]
      %vm141 = vcmask 48128
      %v143 = vsel %vm141, %v139, 0
      %vm145 = vcmask 1045504
      %v147 = vsel %vm145, %v140, 0
      %149 = vmatprep.subr.mxu0 0.0
      %150 = vmatpush1.msra.mxu0 0.0
      %151 = vmatprep.subr.mxu0 0.0
      %152 = vmatpush1.msra.mxu0 0.0
      %153 = vmatprep.subr.mxu0 0.0
      %154 = vmatpush1.msra.mxu0 0.0
      %155 = vmatprep.subr.mxu0 0.0
      %156 = vmatpush1.msra.mxu0 0.0
      %157 = vmatprep.subr.mxu0 0.0
      %158 = vmatpush1.msra.mxu0 0.0
      %159 = vmatprep.subr.mxu0 0.0
      %160 = vmatpush1.msra.mxu0 0.0
      %161 = vmatprep.subr.mxu0 0.0
      %162 = vmatpush1.msra.mxu0 0.0
      %163 = vmatprep.subr.mxu0 0.0
      %164 = vmatpush1.msra.mxu0 0.0
      %165 = vmatprep.subr.mxu0 0.0
      %166 = vmatpush1.msra.mxu0 0.0
      %167 = vmatprep.subr.mxu0 0.0
      %168 = vmatpush1.msra.mxu0 0.0
      %169 = vmatprep.subr.mxu0 0.0
      %170 = vmatpush1.msra.mxu0 0.0
      %171 = vmatprep.subr.mxu0 0.0
      %172 = vmatpush1.msra.mxu0 0.0
      %173 = vmatprep.subr.mxu0 0.0
      %174 = vmatpush1.msra.mxu0 0.0
      %175 = vmatprep.subr.mxu0 0.0
      %176 = vmatpush1.msra.mxu0 0.0
      %177 = vmatprep.subr.mxu0 0.0
      %178 = vmatpush1.msra.mxu0 0.0
      %179 = vmatprep.subr.mxu0 0.0
      %180 = vmatpush1.msra.mxu0 %v147
      %181 = vmatprep.subr.mxu0 0.0
      %182 = vmatpush2.msra.mxu0 0.0
      %183 = vmatprep.subr.mxu0 0.0
      %184 = vmatpush2.msra.mxu0 0.0
      %185 = vmatprep.subr.mxu0 0.0
      %186 = vmatpush2.msra.mxu0 0.0
      %187 = vmatprep.subr.mxu0 0.0
      %188 = vmatpush2.msra.mxu0 0.0
      %189 = vmatprep.subr.mxu0 0.0
      %190 = vmatpush2.msra.mxu0 0.0
      %191 = vmatprep.subr.mxu0 0.0
      %192 = vmatpush2.msra.mxu0 0.0
      %193 = vmatprep.subr.mxu0 0.0
      %194 = vmatpush2.msra.mxu0 0.0
      %195 = vmatprep.subr.mxu0 0.0
      %196 = vmatpush2.msra.mxu0 0.0
      %197 = vmatprep.subr.mxu0 0.0
      %198 = vmatpush2.msra.mxu0 0.0
      %199 = vmatprep.subr.mxu0 0.0
      %200 = vmatpush2.msra.mxu0 0.0
      %201 = vmatprep.subr.mxu0 0.0
      %202 = vmatpush2.msra.mxu0 0.0
      %203 = vmatprep.subr.mxu0 0.0
      %204 = vmatpush2.msra.mxu0 0.0
      %205 = vmatprep.subr.mxu0 0.0
      %206 = vmatpush2.msra.mxu0 0.0
      %207 = vmatprep.subr.mxu0 0.0
      %208 = vmatpush2.msra.mxu0 0.0
      %209 = vmatprep.subr.mxu0 0.0
      %210 = vmatpush2.msra.mxu0 0.0
      %211 = vmatprep.subr.mxu0 0.0
      %212 = vmatpush2.msra.mxu0 0.0
      %213 = vmatprep.mubr.f32.mxu0 0.0
      %214 = vmatmul.mubr.f32.gmra.mxu0 %v143
      %v215 = vpop.f32.mrf.mxu0
      %v216 = vadd.f32 0.0, %v215
      %v217 = vpop.f32.mrf.mxu0
      %218 = vdwg.mxu0
      %v219 = vmax.f32 %v216, 0.0
      %v220 = vadd.f32 %v219, 1.0
      %v221 = vlaneseq
      %v222 = vand.u32 %v221, 127
      %v224 = vand.u32 %v220, 4294967280
      %v225 = vor.u32 %v224, %v222
      %vm227 = vcmp.gt.f32.partialorder %v225, -1.0
      %v228 = vsel %vm227, %v225, 3.4028235e+38
      %vm229 = vcmask 130048
      %v230 = vsel %vm229, %v228, inf
      %231 = vmin.xlane.f32.xlu0 %v230
      %v232 = vpop.xlane.xlu0 %231
      %vm233 = vcmp.gt.f32.partialorder %v225, %v232
      %v234 = vsel %vm233, %v225, 3.4028235e+38
      %v235 = vsel %vm229, %v234, inf
      %236 = vmin.xlane.f32.xlu0 %v235
      %v237 = vpop.xlane.xlu0 %236
      %vm238 = vcmp.gt.f32.partialorder %v225, %v237
      %v239 = vsel %vm238, %v225, 3.4028235e+38
      %v240 = vsel %vm229, %v239, inf
      %241 = vmin.xlane.f32.xlu0 %v240
      %v242 = vpop.xlane.xlu0 %241
      %vm243 = vcmp.gt.f32.partialorder %v225, %v242
      %v244 = vsel %vm243, %v225, 3.4028235e+38
      %v245 = vsel %vm229, %v244, inf
      %246 = vmin.xlane.f32.xlu0 %v245
      %v247 = vpop.xlane.xlu0 %246
      %vm248 = vcmp.gt.f32.partialorder %v225, %v247
      %v249 = vsel %vm248, %v225, 3.4028235e+38
      %v250 = vsel %vm229, %v249, inf
      %251 = vmin.xlane.f32.xlu0 %v250
      %v252 = vpop.xlane.xlu0 %251
      %vm253 = vcmask 7168
      %v254 = vsel %vm253, %v232, %v237
      %vm255 = vcmask 15360
      %v256 = vsel %vm255, %v254, %v242
      %vm257 = vcmask 23552
      %v258 = vsel %vm257, %v256, %v247
      %vm259 = vcmask 31744
      %v260 = vsel %vm259, %v258, %v252
      %v262 = vand.u32 %v260, 15
      %vm263 = vcmask 39936
      %264 = vst.msk [vmem:[%s138] sm:$0xff] %vm263, %v262
      %p265 = scmp.lt.s32.totalorder %s13, 1
      %s266 = scalar_select %p265, %s13, 1
      %s267 = smul.addr %s266, 8
      %s268 = scalar_lea.vmem %s2, %s267
      // Predicated region
      $region29: #{tpu_custom_call.1} parent=27 // pred_check
        %p269 = pneg %p78
      $region30: #{tpu_custom_call.1} parent=27 // pred_check_branch
        %271 = sbr.rel (%p269) target = $region32
      $region31: #{tpu_custom_call.1} parent=27 // pred_region
        _
      $region32: #{tpu_custom_call.1} parent=27 // pred_fallthru
        _
    $region28: #{tpu_custom_call.1} parent=5 // pred_fallthru
      _
    %p272 = scmp.le.s32.totalorder 2, %s8
    // Predicated region
    $region33: #{tpu_custom_call.1} parent=5 // pred_check
      %p273 = pneg %p272
    $region34: #{tpu_custom_call.1} parent=5 // pred_check_branch
      %275 = sbr.rel (%p273) target = $region36
    $region35: #{tpu_custom_call.1} parent=5 // pred_region
      %s276 = ssub.s32 %s8, 2
      // Predicated region
      $region37: #{tpu_custom_call.1} parent=35 // pred_check
        %p277 = pneg %p84
      $region38: #{tpu_custom_call.1} parent=35 // pred_check_branch
        %279 = sbr.rel (%p277) target = $region40
      $region39: #{tpu_custom_call.1} parent=35 // pred_region
        %p280 = scmp.lt.s32.totalorder %s14, 1
        %s281 = scalar_select %p280, %s14, 1
        %s282 = smul.addr %s281, 8
        %s283 = scalar_lea.vmem %s2, %s282
      $region40: #{tpu_custom_call.1} parent=35 // pred_fallthru
        _
    $region36: #{tpu_custom_call.1} parent=5 // pred_fallthru
      _
  $region6: #{tpu_custom_call.1} parent=0 // loop_footer
    %s12 = sadd.s32 1, %s8
  $region7: #{tpu_custom_call.1} parent=0 // loop_footer_branch
    %7 = sbr.rel target = $region3
  $region8: #{tpu_custom_call.1} parent=0 // loop_exit
    _

</llo_original>
